<compile_context>
chip_gen: v5e
topology: v5e:2x2
jax: 0.10.0
libtpu: 0.0.40
codegen_flags: <defaults>
</compile_context>

<pallas_src>
import numpy as np
import jax
import jax.numpy as jnp
from jax.experimental import pallas as pl
from jax.experimental.pallas import tpu as pltpu


def mlp_kernel(x_ref,
               w1_ref, b1_ref, w2_ref, b2_ref, w3_ref, b3_ref,
               w4_ref, b4_ref, w5_ref, b5_ref, wo_ref, bo_ref,
               out_ref):
    h = x_ref[...]  # f32 (TILE_B, in)

    def fused_layer(h, w_ref, b_ref):
        # Linear (+ folded BatchNorm) with bf16 operands / f32 accumulation,
        # then bias + ReLU in f32. Dropout is identity (eval mode).
        z = jnp.dot(h.astype(w_ref.dtype), w_ref[...],
                    preferred_element_type=jnp.float32)
        return jnp.maximum(z + b_ref[...], 0.0)

    h = fused_layer(h, w1_ref, b1_ref)
    h = fused_layer(h, w2_ref, b2_ref)
    h = fused_layer(h, w3_ref, b3_ref)
    h = fused_layer(h, w4_ref, b4_ref)
    h = fused_layer(h, w5_ref, b5_ref)

    # Final 32 -> 1 projection: VPU multiply + cross-lane reduction instead of an
    # N=1 MXU matmul (avoids serializing on the MXU result FIFO for 1 column).
    logits = jnp.sum(h * wo_ref[...], axis=-1, keepdims=True) + bo_ref[...]
    out_ref[...] = jax.nn.sigmoid(logits)


def dnn_adult_mix_forward(x, hidden_params, out_params, tile_b=256):
    """x: [B, input_size] f32.
    hidden_params: list of (W_folded bf16 [in,out], b_folded f32 [1,out]).
    out_params: (wo_row f32 [1, last_hidden], bo f32 [1, 1])."""
    B, D = x.shape
    out_dim = out_params[1].shape[1]

    # Batch tile: multiple of 8 (f32 sublanes); pad batch up to a tile multiple.
    padded8 = ((B + 7) // 8) * 8
    tile_b = max(8, min(tile_b, padded8))
    padded_B = ((B + tile_b - 1) // tile_b) * tile_b
    if padded_B != B:
        x = jnp.pad(x, ((0, padded_B - B), (0, 0)))
    num_tiles = padded_B // tile_b

    flat = []
    in_specs = [pl.BlockSpec((tile_b, D), lambda i: (i, 0))]
    for w, b in list(hidden_params) + [out_params]:
        flat.extend([w, b])
        # Constant index_map -> weights/biases stay resident in VMEM across tiles.
        in_specs.append(pl.BlockSpec(w.shape, lambda i: (0, 0)))
        in_specs.append(pl.BlockSpec(b.shape, lambda i: (0, 0)))

    # Advisory cost estimate for XLA scheduling around the custom call.
    flops = 0
    param_bytes = 0
    for w, b in list(hidden_params) + [out_params]:
        flops += 2 * padded_B * int(np.prod(w.shape))
        param_bytes += w.size * w.dtype.itemsize + b.size * b.dtype.itemsize
    cost = pl.CostEstimate(
        flops=int(flops),
        transcendentals=int(padded_B),  # sigmoid exp per row
        bytes_accessed=int(x.size * 4 + param_bytes + padded_B * out_dim * 4),
    )

    out = pl.pallas_call(
        mlp_kernel,
        out_shape=jax.ShapeDtypeStruct((padded_B, out_dim), jnp.float32),
        grid=(num_tiles,),
        in_specs=in_specs,
        out_specs=pl.BlockSpec((tile_b, out_dim), lambda i: (i, 0)),
        compiler_params=pltpu.CompilerParams(
            dimension_semantics=("parallel",)),  # lets v7x use both TensorCores
        cost_estimate=cost,
    )(x, *flat)

    return out[:B]


def make_params(key, input_size, hidden_sizes=(256, 256, 128, 64, 32),
                output_size=1, eps=1e-5):
    """Deterministic synthetic params; BN folded into each Linear (exact, eval mode).
    Hidden weights cast to bf16; biases and the tiny output row kept f32."""
    sizes = [input_size] + list(hidden_sizes)
    hidden_params = []
    keys = jax.random.split(key, 2 * (len(hidden_sizes) + 1))
    ki = 0
    for li in range(len(hidden_sizes)):
        fan_in, fan_out = sizes[li], sizes[li + 1]
        bound = 1.0 / np.sqrt(fan_in)
        W = jax.random.uniform(keys[ki], (fan_in, fan_out), jnp.float32, -bound, bound); ki += 1
        b = jax.random.uniform(keys[ki], (fan_out,), jnp.float32, -bound, bound); ki += 1
        # BatchNorm1d defaults: gamma=1, beta=0, running_mean=0, running_var=1
        gamma = jnp.ones((fan_out,), jnp.float32)
        beta = jnp.zeros((fan_out,), jnp.float32)
        r_mean = jnp.zeros((fan_out,), jnp.float32)
        r_var = jnp.ones((fan_out,), jnp.float32)
        scale = gamma / jnp.sqrt(r_var + eps)
        shift = beta - r_mean * scale
        W_f = (W * scale[None, :]).astype(jnp.bfloat16)
        b_f = (scale * b + shift).reshape(1, fan_out)
        hidden_params.append((W_f, b_f))
    # output layer (no BN); stored as a (1, last_hidden) row for the VPU reduction.
    fan_in, fan_out = sizes[-1], output_size
    bound = 1.0 / np.sqrt(fan_in)
    Wo = jax.random.uniform(keys[ki], (fan_in, fan_out), jnp.float32, -bound, bound); ki += 1
    bo = jax.random.uniform(keys[ki], (fan_out,), jnp.float32, -bound, bound); ki += 1
    out_params = (Wo.T.reshape(1, fan_in), bo.reshape(1, fan_out))
    return hidden_params, out_params


def reference_forward_bf16(x, hidden_params, out_params):
    """Mirrors the kernel math (bf16 operands, f32 accumulation)."""
    h = x
    for w, b in hidden_params:
        z = jnp.dot(h.astype(w.dtype), w, preferred_element_type=jnp.float32) + b
        h = jnp.maximum(z, 0.0)
    wo_row, bo = out_params
    logits = jnp.sum(h * wo_row, axis=-1, keepdims=True) + bo
    return jax.nn.sigmoid(logits)


def reference_forward_f32(x, hidden_params, out_params):
    """Pure f32 reference (weights up-cast) for a sanity bound on bf16 error."""
    h = x
    for w, b in hidden_params:
        h = jnp.maximum(h @ w.astype(jnp.float32) + b, 0.0)
    wo_row, bo = out_params
    return jax.nn.sigmoid(h @ wo_row.T + bo)


if __name__ == "__main__":
    key = jax.random.PRNGKey(0)
    k_x, k_x2, k_p = jax.random.split(key, 3)

    input_size = 32  # small "Adult"-style feature vector
    hidden_params, out_params = make_params(k_p, input_size)

    # Small batch (single grid tile).
    batch = 8
    x = jax.random.normal(k_x, (batch, input_size), jnp.float32)
    out = jax.block_until_ready(dnn_adult_mix_forward(x, hidden_params, out_params))
    assert out.shape == (batch, 1)
    ref_b = reference_forward_bf16(x, hidden_params, out_params)
    ref_f = reference_forward_f32(x, hidden_params, out_params)
    np.testing.assert_allclose(np.asarray(out), np.asarray(ref_b), rtol=2e-3, atol=2e-3)
    np.testing.assert_allclose(np.asarray(out), np.asarray(ref_f), rtol=3e-2, atol=3e-2)

    # Larger, non-multiple batch to exercise the batch grid + padding path.
    batch2 = 300
    x2 = jax.random.normal(k_x2, (batch2, input_size), jnp.float32)
    out2 = jax.block_until_ready(
        dnn_adult_mix_forward(x2, hidden_params, out_params, tile_b=128))
    assert out2.shape == (batch2, 1)
    ref2 = reference_forward_bf16(x2, hidden_params, out_params)
    np.testing.assert_allclose(np.asarray(out2), np.asarray(ref2), rtol=2e-3, atol=2e-3)

    print("KERNEL_OK")
</pallas_src>

<mosaic_0001>
module attributes {stable_mosaic.version = 11 : i64} {
  func.func @mlp_kernel(%arg0: i32, %arg1: memref<8x32xf32, #tpu.memory_space<vmem>>, %arg2: memref<32x256xbf16, #tpu.memory_space<vmem>>, %arg3: memref<1x256xf32, #tpu.memory_space<vmem>>, %arg4: memref<256x256xbf16, #tpu.memory_space<vmem>>, %arg5: memref<1x256xf32, #tpu.memory_space<vmem>>, %arg6: memref<256x128xbf16, #tpu.memory_space<vmem>>, %arg7: memref<1x128xf32, #tpu.memory_space<vmem>>, %arg8: memref<128x64xbf16, #tpu.memory_space<vmem>>, %arg9: memref<1x64xf32, #tpu.memory_space<vmem>>, %arg10: memref<64x32xbf16, #tpu.memory_space<vmem>>, %arg11: memref<1x32xf32, #tpu.memory_space<vmem>>, %arg12: memref<1x32xf32, #tpu.memory_space<vmem>>, %arg13: memref<1x1xf32, #tpu.memory_space<vmem>>, %arg14: memref<8x1xf32, #tpu.memory_space<vmem>>) attributes {dimension_semantics = [#tpu.dimension_semantics<parallel>], iteration_bounds = array<i64: 1>, scalar_prefetch = 0 : i64, scratch_operands = 0 : i64, tpu.core_type = #tpu.core_type<tc>, window_params = [{transform_indices = @transform_0, window_bounds = array<i64: 8, 32>}, {pipeline_mode = #tpu.pipeline_mode<synchronous>, transform_indices = @transform_1, window_bounds = array<i64: 32, 256>}, {pipeline_mode = #tpu.pipeline_mode<synchronous>, transform_indices = @transform_2, window_bounds = array<i64: 1, 256>}, {pipeline_mode = #tpu.pipeline_mode<synchronous>, transform_indices = @transform_3, window_bounds = array<i64: 256, 256>}, {pipeline_mode = #tpu.pipeline_mode<synchronous>, transform_indices = @transform_4, window_bounds = array<i64: 1, 256>}, {pipeline_mode = #tpu.pipeline_mode<synchronous>, transform_indices = @transform_5, window_bounds = array<i64: 256, 128>}, {pipeline_mode = #tpu.pipeline_mode<synchronous>, transform_indices = @transform_6, window_bounds = array<i64: 1, 128>}, {pipeline_mode = #tpu.pipeline_mode<synchronous>, transform_indices = @transform_7, window_bounds = array<i64: 128, 64>}, {pipeline_mode = #tpu.pipeline_mode<synchronous>, transform_indices = @transform_8, window_bounds = array<i64: 1, 64>}, {pipeline_mode = #tpu.pipeline_mode<synchronous>, transform_indices = @transform_9, window_bounds = array<i64: 64, 32>}, {pipeline_mode = #tpu.pipeline_mode<synchronous>, transform_indices = @transform_10, window_bounds = array<i64: 1, 32>}, {pipeline_mode = #tpu.pipeline_mode<synchronous>, transform_indices = @transform_11, window_bounds = array<i64: 1, 32>}, {pipeline_mode = #tpu.pipeline_mode<synchronous>, transform_indices = @transform_12, window_bounds = array<i64: 1, 1>}, {transform_indices = @transform_13, window_bounds = array<i64: 8, 1>}]} {
    %c0 = arith.constant 0 : index
    %c0_0 = arith.constant 0 : index
    %0 = vector.load %arg1[%c0, %c0_0] : memref<8x32xf32, #tpu.memory_space<vmem>>, vector<8x32xf32>
    %1 = arith.truncf %0 : vector<8x32xf32> to vector<8x32xbf16>
    %c0_1 = arith.constant 0 : index
    %c0_2 = arith.constant 0 : index
    %2 = vector.load %arg2[%c0_1, %c0_2] : memref<32x256xbf16, #tpu.memory_space<vmem>>, vector<32x256xbf16>
    %cst = arith.constant dense<0.000000e+00> : vector<8x256xf32>
    %3 = tpu.matmul %1, %2, %cst {dimension_numbers = #tpu.dot_dimension_numbers<[1], [0], [0], [1], [0, 0, 1, 1], [], []>} : vector<8x32xbf16>, vector<32x256xbf16>, vector<8x256xf32> -> vector<8x256xf32>
    %c0_3 = arith.constant 0 : index
    %c0_4 = arith.constant 0 : index
    %4 = vector.load %arg3[%c0_3, %c0_4] : memref<1x256xf32, #tpu.memory_space<vmem>>, vector<1x256xf32>
    %5 = vector.broadcast %4 : vector<1x256xf32> to vector<8x256xf32>
    %6 = arith.addf %3, %5 : vector<8x256xf32>
    %cst_5 = arith.constant 0.000000e+00 : f32
    %7 = vector.broadcast %cst_5 : f32 to vector<8x256xf32>
    %8 = arith.maximumf %6, %7 : vector<8x256xf32>
    %9 = arith.truncf %8 : vector<8x256xf32> to vector<8x256xbf16>
    %c0_6 = arith.constant 0 : index
    %c0_7 = arith.constant 0 : index
    %10 = vector.load %arg4[%c0_6, %c0_7] : memref<256x256xbf16, #tpu.memory_space<vmem>>, vector<256x256xbf16>
    %cst_8 = arith.constant dense<0.000000e+00> : vector<8x256xf32>
    %11 = tpu.matmul %9, %10, %cst_8 {dimension_numbers = #tpu.dot_dimension_numbers<[1], [0], [0], [1], [0, 0, 1, 1], [], []>} : vector<8x256xbf16>, vector<256x256xbf16>, vector<8x256xf32> -> vector<8x256xf32>
    %c0_9 = arith.constant 0 : index
    %c0_10 = arith.constant 0 : index
    %12 = vector.load %arg5[%c0_9, %c0_10] : memref<1x256xf32, #tpu.memory_space<vmem>>, vector<1x256xf32>
    %13 = vector.broadcast %12 : vector<1x256xf32> to vector<8x256xf32>
    %14 = arith.addf %11, %13 : vector<8x256xf32>
    %cst_11 = arith.constant 0.000000e+00 : f32
    %15 = vector.broadcast %cst_11 : f32 to vector<8x256xf32>
    %16 = arith.maximumf %14, %15 : vector<8x256xf32>
    %17 = arith.truncf %16 : vector<8x256xf32> to vector<8x256xbf16>
    %c0_12 = arith.constant 0 : index
    %c0_13 = arith.constant 0 : index
    %18 = vector.load %arg6[%c0_12, %c0_13] : memref<256x128xbf16, #tpu.memory_space<vmem>>, vector<256x128xbf16>
    %cst_14 = arith.constant dense<0.000000e+00> : vector<8x128xf32>
    %19 = tpu.matmul %17, %18, %cst_14 {dimension_numbers = #tpu.dot_dimension_numbers<[1], [0], [0], [1], [0, 0, 1, 1], [], []>} : vector<8x256xbf16>, vector<256x128xbf16>, vector<8x128xf32> -> vector<8x128xf32>
    %c0_15 = arith.constant 0 : index
    %c0_16 = arith.constant 0 : index
    %20 = vector.load %arg7[%c0_15, %c0_16] : memref<1x128xf32, #tpu.memory_space<vmem>>, vector<1x128xf32>
    %21 = vector.broadcast %20 : vector<1x128xf32> to vector<8x128xf32>
    %22 = arith.addf %19, %21 : vector<8x128xf32>
    %cst_17 = arith.constant 0.000000e+00 : f32
    %23 = vector.broadcast %cst_17 : f32 to vector<8x128xf32>
    %24 = arith.maximumf %22, %23 : vector<8x128xf32>
    %25 = arith.truncf %24 : vector<8x128xf32> to vector<8x128xbf16>
    %c0_18 = arith.constant 0 : index
    %c0_19 = arith.constant 0 : index
    %26 = vector.load %arg8[%c0_18, %c0_19] : memref<128x64xbf16, #tpu.memory_space<vmem>>, vector<128x64xbf16>
    %cst_20 = arith.constant dense<0.000000e+00> : vector<8x64xf32>
    %27 = tpu.matmul %25, %26, %cst_20 {dimension_numbers = #tpu.dot_dimension_numbers<[1], [0], [0], [1], [0, 0, 1, 1], [], []>} : vector<8x128xbf16>, vector<128x64xbf16>, vector<8x64xf32> -> vector<8x64xf32>
    %c0_21 = arith.constant 0 : index
    %c0_22 = arith.constant 0 : index
    %28 = vector.load %arg9[%c0_21, %c0_22] : memref<1x64xf32, #tpu.memory_space<vmem>>, vector<1x64xf32>
    %29 = vector.broadcast %28 : vector<1x64xf32> to vector<8x64xf32>
    %30 = arith.addf %27, %29 : vector<8x64xf32>
    %cst_23 = arith.constant 0.000000e+00 : f32
    %31 = vector.broadcast %cst_23 : f32 to vector<8x64xf32>
    %32 = arith.maximumf %30, %31 : vector<8x64xf32>
    %33 = arith.truncf %32 : vector<8x64xf32> to vector<8x64xbf16>
    %c0_24 = arith.constant 0 : index
    %c0_25 = arith.constant 0 : index
    %34 = vector.load %arg10[%c0_24, %c0_25] : memref<64x32xbf16, #tpu.memory_space<vmem>>, vector<64x32xbf16>
    %cst_26 = arith.constant dense<0.000000e+00> : vector<8x32xf32>
    %35 = tpu.matmul %33, %34, %cst_26 {dimension_numbers = #tpu.dot_dimension_numbers<[1], [0], [0], [1], [0, 0, 1, 1], [], []>} : vector<8x64xbf16>, vector<64x32xbf16>, vector<8x32xf32> -> vector<8x32xf32>
    %c0_27 = arith.constant 0 : index
    %c0_28 = arith.constant 0 : index
    %36 = vector.load %arg11[%c0_27, %c0_28] : memref<1x32xf32, #tpu.memory_space<vmem>>, vector<1x32xf32>
    %37 = vector.broadcast %36 : vector<1x32xf32> to vector<8x32xf32>
    %38 = arith.addf %35, %37 : vector<8x32xf32>
    %cst_29 = arith.constant 0.000000e+00 : f32
    %39 = vector.broadcast %cst_29 : f32 to vector<8x32xf32>
    %40 = arith.maximumf %38, %39 : vector<8x32xf32>
    %c0_30 = arith.constant 0 : index
    %c0_31 = arith.constant 0 : index
    %41 = vector.load %arg12[%c0_30, %c0_31] : memref<1x32xf32, #tpu.memory_space<vmem>>, vector<1x32xf32>
    %42 = vector.broadcast %41 : vector<1x32xf32> to vector<8x32xf32>
    %43 = arith.mulf %40, %42 : vector<8x32xf32>
    %cst_32 = arith.constant dense<0.000000e+00> : vector<8xf32>
    %44 = vector.multi_reduction <add>, %43, %cst_32 [1] : vector<8x32xf32> to vector<8xf32>
    %45 = vector.shape_cast %44 : vector<8xf32> to vector<8x1xf32>
    %c0_33 = arith.constant 0 : index
    %c0_34 = arith.constant 0 : index
    %46 = vector.load %arg13[%c0_33, %c0_34] : memref<1x1xf32, #tpu.memory_space<vmem>>, vector<1x1xf32>
    %47 = vector.broadcast %46 : vector<1x1xf32> to vector<8x1xf32>
    %48 = arith.addf %45, %47 : vector<8x1xf32>
    %49 = arith.negf %48 : vector<8x1xf32>
    %50 = math.exp %49 : vector<8x1xf32>
    %cst_35 = arith.constant 1.000000e+00 : f32
    %51 = vector.broadcast %cst_35 : f32 to vector<8x1xf32>
    %52 = arith.addf %51, %50 : vector<8x1xf32>
    %53 = arith.divf %51, %52 : vector<8x1xf32>
    %c0_36 = arith.constant 0 : index
    %c0_37 = arith.constant 0 : index
    %54 = vector.load %arg14[%c0_36, %c0_37] : memref<8x1xf32, #tpu.memory_space<vmem>>, vector<8x1xf32>
    tpu.vector_store %arg14[%c0_36, %c0_37], %53 {strides = array<i32>} : memref<8x1xf32, #tpu.memory_space<vmem>>, vector<8x1xf32>,
    return
  }
  func.func @transform_0(%arg0: i32) -> (i32, i32) {
    %c0_i32 = arith.constant 0 : i32
    %c0_i32_0 = arith.constant 0 : i32
    return %arg0, %c0_i32 : i32, i32
  }
  func.func @transform_1(%arg0: i32) -> (i32, i32) {
    %c0_i32 = arith.constant 0 : i32
    %c0_i32_0 = arith.constant 0 : i32
    %c0_i32_1 = arith.constant 0 : i32
    return %c0_i32, %c0_i32_0 : i32, i32
  }
  func.func @transform_2(%arg0: i32) -> (i32, i32) {
    %c0_i32 = arith.constant 0 : i32
    %c0_i32_0 = arith.constant 0 : i32
    %c0_i32_1 = arith.constant 0 : i32
    return %c0_i32, %c0_i32_0 : i32, i32
  }
  func.func @transform_3(%arg0: i32) -> (i32, i32) {
    %c0_i32 = arith.constant 0 : i32
    %c0_i32_0 = arith.constant 0 : i32
    %c0_i32_1 = arith.constant 0 : i32
    return %c0_i32, %c0_i32_0 : i32, i32
  }
  func.func @transform_4(%arg0: i32) -> (i32, i32) {
    %c0_i32 = arith.constant 0 : i32
    %c0_i32_0 = arith.constant 0 : i32
    %c0_i32_1 = arith.constant 0 : i32
    return %c0_i32, %c0_i32_0 : i32, i32
  }
  func.func @transform_5(%arg0: i32) -> (i32, i32) {
    %c0_i32 = arith.constant 0 : i32
    %c0_i32_0 = arith.constant 0 : i32
    %c0_i32_1 = arith.constant 0 : i32
    return %c0_i32, %c0_i32_0 : i32, i32
  }
  func.func @transform_6(%arg0: i32) -> (i32, i32) {
    %c0_i32 = arith.constant 0 : i32
    %c0_i32_0 = arith.constant 0 : i32
    %c0_i32_1 = arith.constant 0 : i32
    return %c0_i32, %c0_i32_0 : i32, i32
  }
  func.func @transform_7(%arg0: i32) -> (i32, i32) {
    %c0_i32 = arith.constant 0 : i32
    %c0_i32_0 = arith.constant 0 : i32
    %c0_i32_1 = arith.constant 0 : i32
    return %c0_i32, %c0_i32_0 : i32, i32
  }
  func.func @transform_8(%arg0: i32) -> (i32, i32) {
    %c0_i32 = arith.constant 0 : i32
    %c0_i32_0 = arith.constant 0 : i32
    %c0_i32_1 = arith.constant 0 : i32
    return %c0_i32, %c0_i32_0 : i32, i32
  }
  func.func @transform_9(%arg0: i32) -> (i32, i32) {
    %c0_i32 = arith.constant 0 : i32
    %c0_i32_0 = arith.constant 0 : i32
    %c0_i32_1 = arith.constant 0 : i32
    return %c0_i32, %c0_i32_0 : i32, i32
  }
  func.func @transform_10(%arg0: i32) -> (i32, i32) {
    %c0_i32 = arith.constant 0 : i32
    %c0_i32_0 = arith.constant 0 : i32
    %c0_i32_1 = arith.constant 0 : i32
    return %c0_i32, %c0_i32_0 : i32, i32
  }
  func.func @transform_11(%arg0: i32) -> (i32, i32) {
    %c0_i32 = arith.constant 0 : i32
    %c0_i32_0 = arith.constant 0 : i32
    %c0_i32_1 = arith.constant 0 : i32
    return %c0_i32, %c0_i32_0 : i32, i32
  }
  func.func @transform_12(%arg0: i32) -> (i32, i32) {
    %c0_i32 = arith.constant 0 : i32
    %c0_i32_0 = arith.constant 0 : i32
    %c0_i32_1 = arith.constant 0 : i32
    return %c0_i32, %c0_i32_0 : i32, i32
  }
  func.func @transform_13(%arg0: i32) -> (i32, i32) {
    %c0_i32 = arith.constant 0 : i32
    %c0_i32_0 = arith.constant 0 : i32
    return %arg0, %c0_i32 : i32, i32
  }
}

</mosaic_0001>

<llo_original>
// kernel: tpu_custom_call.1
$region0: #{tpu_custom_call.1}
  #allocation0 [shape = 'u32[]', space=smem, size = 0x4, offset = 0x4, fixed_abs, tag = 'smem constant byte address 0x4 - core index']
  #allocation1 [shape = 'u32[72,128]{1,0:T(1,128)}', space=vmem, size = 0x9000, scoped, tag = 'internal scratch']
  #allocation2 [shape = 'f32[1,1]{1,0:T(1,128)S(1)}', space=vmem, size = 0x200, scoped, tag = 'scoped memory for tpu_custom_call.1']
  %s0 = inlined_call_operand.vmem [shape: f32[8,32], index: 0, kind: input, shape index: {}]
  %s1 = inlined_call_operand.hbm [shape: bf16[32,256], index: 1, kind: input, shape index: {}]
  %s2 = inlined_call_operand.vmem [shape: f32[1,256], index: 2, kind: input, shape index: {}]
  %s3 = inlined_call_operand.hbm [shape: bf16[256,256], index: 3, kind: input, shape index: {}]
  %s4 = inlined_call_operand.vmem [shape: f32[1,256], index: 4, kind: input, shape index: {}]
  %s5 = inlined_call_operand.vmem [shape: bf16[256,128], index: 5, kind: input, shape index: {}]
  %s6 = inlined_call_operand.vmem [shape: f32[1,128], index: 6, kind: input, shape index: {}]
  %s7 = inlined_call_operand.vmem [shape: bf16[128,64], index: 7, kind: input, shape index: {}]
  %s8 = inlined_call_operand.vmem [shape: f32[1,64], index: 8, kind: input, shape index: {}]
  %s9 = inlined_call_operand.vmem [shape: bf16[64,32], index: 9, kind: input, shape index: {}]
  %s10 = inlined_call_operand.vmem [shape: f32[1,32], index: 10, kind: input, shape index: {}]
  %s11 = inlined_call_operand.vmem [shape: f32[1,32], index: 11, kind: input, shape index: {}]
  %s12 = inlined_call_operand.<no memory space> [shape: f32[1,1], index: 12, kind: input, shape index: {}]
  %s13 = inlined_call_operand.vmem [shape: f32[8,1], index: 13, kind: output, shape index: {}]
  %s14 = sld [smem:[#allocation0]]
  $region70: #{tpu_custom_call.1} parent=0
    _
  %s16 = ssub.s32 1, %s14
  %s17 = scalar_select 0, %s16, %s14
  %v18 = vstv %s12
  %19 = vst [vmem:[#allocation2] sm:$0x1] %v18
  $region1: #{tpu_custom_call.1} parent=0
    #allocation3 [shape = 'u8[16384]{0}', space=vmem, size = 0x4000, scoped, tag = 'input window, operand 1, single buffered']
    #allocation4 [shape = 's32[1]{0}', space=sflag, size = 0x4, scoped, tag = 'scoped memory for tpu_custom_call.1']
    #allocation5 [shape = 'u8[131072]{0}', space=vmem, size = 0x20000, scoped, tag = 'input window, operand 3, single buffered']
    #allocation6 [shape = 's32[1]{0}', space=sflag, size = 0x4, scoped, tag = 'scoped memory for tpu_custom_call.1']
    %20 = vsyncpa [#allocation4], 0
    %21 = vsyncpa [#allocation6], 0
    // Predicated region
    $region2: #{tpu_custom_call.1} parent=1 // pred_check
      _
    $region3: #{tpu_custom_call.1} parent=1 // pred_check_branch
      %23 = sbr.rel (0) target = $region5
    $region4: #{tpu_custom_call.1} parent=1 // pred_region
      _
    $region5: #{tpu_custom_call.1} parent=1 // pred_fallthru
      _
    // Predicated region
    $region6: #{tpu_custom_call.1} parent=1 // pred_check
      _
    $region7: #{tpu_custom_call.1} parent=1 // pred_check_branch
      %25 = sbr.rel (0) target = $region9
    $region8: #{tpu_custom_call.1} parent=1 // pred_region
      %27 = vsyncadd [#allocation4], 0
      %s28 = sshll.u32 %s1, 4
      %s29 = int_to_ptr.hbm [resolvable:$true] %s28
      %s30 = sshll.u32 [#allocation3], 4
      %s31 = int_to_ptr.vmem [resolvable:$true] %s30
      %36 = dma.hbm_to_vmem [thread:$0]  %s29, 512, %s31, [#allocation4], 128, 128, 8
    $region9: #{tpu_custom_call.1} parent=1 // pred_fallthru
      _
    // Predicated region
    $region10: #{tpu_custom_call.1} parent=1 // pred_check
      _
    $region11: #{tpu_custom_call.1} parent=1 // pred_check_branch
      %38 = sbr.rel (0) target = $region13
    $region12: #{tpu_custom_call.1} parent=1 // pred_region
      _
    $region13: #{tpu_custom_call.1} parent=1 // pred_fallthru
      _
    // Predicated region
    $region14: #{tpu_custom_call.1} parent=1 // pred_check
      _
    $region15: #{tpu_custom_call.1} parent=1 // pred_check_branch
      %40 = sbr.rel (0) target = $region17
    $region16: #{tpu_custom_call.1} parent=1 // pred_region
      %42 = vsyncadd [#allocation6], 0
      %s43 = sshll.u32 %s3, 4
      %s44 = int_to_ptr.hbm [resolvable:$true] %s43
      %s45 = sshll.u32 [#allocation5], 4
      %s46 = int_to_ptr.vmem [resolvable:$true] %s45
      %51 = dma.hbm_to_vmem [thread:$0]  %s44, 4096, %s46, [#allocation6], 128, 128, 8
    $region17: #{tpu_custom_call.1} parent=1 // pred_fallthru
      _
    // Predicated region
    $region18: #{tpu_custom_call.1} parent=1 // pred_check
      _
    $region19: #{tpu_custom_call.1} parent=1 // pred_check_branch
      %53 = sbr.rel (0) target = $region21
    $region20: #{tpu_custom_call.1} parent=1 // pred_region
      _
    $region21: #{tpu_custom_call.1} parent=1 // pred_fallthru
      _
    // Predicated region
    $region22: #{tpu_custom_call.1} parent=1 // pred_check
      _
    $region23: #{tpu_custom_call.1} parent=1 // pred_check_branch
      %55 = sbr.rel (0) target = $region25
    $region24: #{tpu_custom_call.1} parent=1 // pred_region
      _
    $region25: #{tpu_custom_call.1} parent=1 // pred_fallthru
      _
    // Predicated region
    $region26: #{tpu_custom_call.1} parent=1 // pred_check
      _
    $region27: #{tpu_custom_call.1} parent=1 // pred_check_branch
      %57 = sbr.rel (0) target = $region29
    $region28: #{tpu_custom_call.1} parent=1 // pred_region
      _
    $region29: #{tpu_custom_call.1} parent=1 // pred_fallthru
      _
    // Predicated region
    $region30: #{tpu_custom_call.1} parent=1 // pred_check
      _
    $region31: #{tpu_custom_call.1} parent=1 // pred_check_branch
      %59 = sbr.rel (0) target = $region33
    $region32: #{tpu_custom_call.1} parent=1 // pred_region
      _
    $region33: #{tpu_custom_call.1} parent=1 // pred_fallthru
      _
    // Predicated region
    $region34: #{tpu_custom_call.1} parent=1 // pred_check
      _
    $region35: #{tpu_custom_call.1} parent=1 // pred_check_branch
      %61 = sbr.rel (0) target = $region37
    $region36: #{tpu_custom_call.1} parent=1 // pred_region
      _
    $region37: #{tpu_custom_call.1} parent=1 // pred_fallthru
      _
    // Predicated region
    $region38: #{tpu_custom_call.1} parent=1 // pred_check
      _
    $region39: #{tpu_custom_call.1} parent=1 // pred_check_branch
      %63 = sbr.rel (0) target = $region41
    $region40: #{tpu_custom_call.1} parent=1 // pred_region
      _
    $region41: #{tpu_custom_call.1} parent=1 // pred_fallthru
      _
    // Predicated region
    $region42: #{tpu_custom_call.1} parent=1 // pred_check
      _
    $region43: #{tpu_custom_call.1} parent=1 // pred_check_branch
      %65 = sbr.rel (0) target = $region45
    $region44: #{tpu_custom_call.1} parent=1 // pred_region
      _
    $region45: #{tpu_custom_call.1} parent=1 // pred_fallthru
      _
    // Predicated region
    $region46: #{tpu_custom_call.1} parent=1 // pred_check
      _
    $region47: #{tpu_custom_call.1} parent=1 // pred_check_branch
      %67 = sbr.rel (0) target = $region49
    $region48: #{tpu_custom_call.1} parent=1 // pred_region
      _
    $region49: #{tpu_custom_call.1} parent=1 // pred_fallthru
      _
    // Predicated region
    $region50: #{tpu_custom_call.1} parent=1 // pred_check
      _
    $region51: #{tpu_custom_call.1} parent=1 // pred_check_branch
      %69 = sbr.rel (0) target = $region53
    $region52: #{tpu_custom_call.1} parent=1 // pred_region
      _
    $region53: #{tpu_custom_call.1} parent=1 // pred_fallthru
      _
    // Predicated region
    $region54: #{tpu_custom_call.1} parent=1 // pred_check
      _
    $region55: #{tpu_custom_call.1} parent=1 // pred_check_branch
      %71 = sbr.rel (0) target = $region57
    $region56: #{tpu_custom_call.1} parent=1 // pred_region
      %73 = dma.done [#allocation4], 512
    $region57: #{tpu_custom_call.1} parent=1 // pred_fallthru
      _
    // Predicated region
    $region58: #{tpu_custom_call.1} parent=1 // pred_check
      _
    $region59: #{tpu_custom_call.1} parent=1 // pred_check_branch
      %75 = sbr.rel (0) target = $region61
    $region60: #{tpu_custom_call.1} parent=1 // pred_region
      %77 = dma.done [#allocation6], 4096
    $region61: #{tpu_custom_call.1} parent=1 // pred_fallthru
      _
    %v79 = vld [vmem:[%s0] sm:$0xff]
    %v80 = vpack.c.bf16 %v79, %v79
    %v81 = vld [vmem:[#allocation3] sm:$0xff]
    %v82 = vld [vmem:[#allocation3 + $0x8] sm:$0xff]
    %v83 = vld [vmem:[#allocation3 + $0x10] sm:$0xff]
    %v84 = vld [vmem:[#allocation3 + $0x18] sm:$0xff]
    %v85 = vld [vmem:[%s2] sm:$0x3]
    %v87 = vperm.slane %v85, 0
    %v88 = vperm.slane %v85, 1
    %v95 = vunpack.c.l.b16 %v81
    %v96 = vunpack.c.h.b16 %v81
    %v97 = vunpack.c.l.b16 %v82
    %v98 = vunpack.c.h.b16 %v82
    %v99 = vunpack.c.l.b16 %v83
    %v100 = vunpack.c.h.b16 %v83
    %v101 = vunpack.c.l.b16 %v84
    %v102 = vunpack.c.h.b16 %v84
    %v103 = vpack.c.b16 %v97, %v95
    %v104 = vpack.c.b16 %v98, %v96
    %v105 = vpack.c.b16 %v101, %v99
    %v106 = vpack.c.b16 %v102, %v100
    %vm111 = vcmask 261120
    %v113 = vsel %vm111, %v80, 0
    %115 = vmatpush.bf16.msra.mxu0 0
    %116 = vmatpush.bf16.msra.mxu0 0
    %117 = vmatpush.bf16.msra.mxu0 0
    %118 = vmatpush.bf16.msra.mxu0 0
    %119 = vmatpush.bf16.msra.mxu0 0
    %120 = vmatpush.bf16.msra.mxu0 0
    %121 = vmatpush.bf16.msra.mxu0 %v105
    %122 = vmatpush.bf16.msra.mxu0 %v103
    %123 = vmatmul.bf16.gmra.mxu0 %v113
    %v124 = vpop.f32.mrf.mxu0
    %v125 = vadd.f32 %v87, %v124
    %v126 = vpop.f32.mrf.mxu0
    %127 = vdwg.mxu0
    %128 = vmatpush.bf16.msra.mxu0 0
    %129 = vmatpush.bf16.msra.mxu0 0
    %130 = vmatpush.bf16.msra.mxu0 0
    %131 = vmatpush.bf16.msra.mxu0 0
    %132 = vmatpush.bf16.msra.mxu0 0
    %133 = vmatpush.bf16.msra.mxu0 0
    %134 = vmatpush.bf16.msra.mxu0 %v106
    %135 = vmatpush.bf16.msra.mxu0 %v104
    %136 = vmatmul.bf16.gmra.mxu0 %v113
    %v137 = vpop.f32.mrf.mxu0
    %v138 = vadd.f32 %v88, %v137
    %v139 = vpop.f32.mrf.mxu0
    %140 = vdwg.mxu0
    %v141 = vmax.f32 %v125, 0.0
    %v142 = vmax.f32 %v138, 0.0
    %v143 = vpack.c.bf16 %v141, %v141
    %v144 = vpack.c.bf16 %v142, %v142
    %v145 = vld [vmem:[#allocation5] sm:$0xff]
    %v146 = vld [vmem:[#allocation5 + $0x8] sm:$0xff]
    %v147 = vld [vmem:[#allocation5 + $0x10] sm:$0xff]
    %v148 = vld [vmem:[#allocation5 + $0x18] sm:$0xff]
    %v149 = vld [vmem:[#allocation5 + $0x20] sm:$0xff]
    %v150 = vld [vmem:[#allocation5 + $0x28] sm:$0xff]
    %v151 = vld [vmem:[#allocation5 + $0x30] sm:$0xff]
    %v152 = vld [vmem:[#allocation5 + $0x38] sm:$0xff]
    %v153 = vld [vmem:[#allocation5 + $0x40] sm:$0xff]
    %v154 = vld [vmem:[#allocation5 + $0x48] sm:$0xff]
    %v155 = vld [vmem:[#allocation5 + $0x50] sm:$0xff]
    %v156 = vld [vmem:[#allocation5 + $0x58] sm:$0xff]
    %v157 = vld [vmem:[#allocation5 + $0x60] sm:$0xff]
    %v158 = vld [vmem:[#allocation5 + $0x68] sm:$0xff]
    %v159 = vld [vmem:[#allocation5 + $0x70] sm:$0xff]
    %v160 = vld [vmem:[#allocation5 + $0x78] sm:$0xff]
    %v161 = vld [vmem:[#allocation5 + $0x80] sm:$0xff]
    %v162 = vld [vmem:[#allocation5 + $0x88] sm:$0xff]
    %v163 = vld [vmem:[#allocation5 + $0x90] sm:$0xff]
    %v164 = vld [vmem:[#allocation5 + $0x98] sm:$0xff]
    %v165 = vld [vmem:[#allocation5 + $0xa0] sm:$0xff]
    %v166 = vld [vmem:[#allocation5 + $0xa8] sm:$0xff]
    %v167 = vld [vmem:[#allocation5 + $0xb0] sm:$0xff]
    %v168 = vld [vmem:[#allocation5 + $0xb8] sm:$0xff]
    %v169 = vld [vmem:[#allocation5 + $0xc0] sm:$0xff]
    %v170 = vld [vmem:[#allocation5 + $0xc8] sm:$0xff]
    %v171 = vld [vmem:[#allocation5 + $0xd0] sm:$0xff]
    %v172 = vld [vmem:[#allocation5 + $0xd8] sm:$0xff]
    %v173 = vld [vmem:[#allocation5 + $0xe0] sm:$0xff]
    %v174 = vld [vmem:[#allocation5 + $0xe8] sm:$0xff]
    %v175 = vld [vmem:[#allocation5 + $0xf0] sm:$0xff]
    %v176 = vld [vmem:[#allocation5 + $0xf8] sm:$0xff]
    %v177 = vld [vmem:[%s4] sm:$0x3]
    %v179 = vperm.slane %v177, 0
    %v180 = vperm.slane %v177, 1
    %v215 = vunpack.c.l.b16 %v145
    %v216 = vunpack.c.h.b16 %v145
    %v217 = vunpack.c.l.b16 %v146
    %v218 = vunpack.c.h.b16 %v146
    %v219 = vunpack.c.l.b16 %v147
    %v220 = vunpack.c.h.b16 %v147
    %v221 = vunpack.c.l.b16 %v148
    %v222 = vunpack.c.h.b16 %v148
    %v223 = vunpack.c.l.b16 %v149
    %v224 = vunpack.c.h.b16 %v149
    %v225 = vunpack.c.l.b16 %v150
    %v226 = vunpack.c.h.b16 %v150
    %v227 = vunpack.c.l.b16 %v151
    %v228 = vunpack.c.h.b16 %v151
    %v229 = vunpack.c.l.b16 %v152
    %v230 = vunpack.c.h.b16 %v152
    %v231 = vunpack.c.l.b16 %v153
    %v232 = vunpack.c.h.b16 %v153
    %v233 = vunpack.c.l.b16 %v154
    %v234 = vunpack.c.h.b16 %v154
    %v235 = vunpack.c.l.b16 %v155
    %v236 = vunpack.c.h.b16 %v155
    %v237 = vunpack.c.l.b16 %v156
    %v238 = vunpack.c.h.b16 %v156
    %v239 = vunpack.c.l.b16 %v157
    %v240 = vunpack.c.h.b16 %v157
    %v241 = vunpack.c.l.b16 %v158
    %v242 = vunpack.c.h.b16 %v158
    %v243 = vunpack.c.l.b16 %v159
    %v244 = vunpack.c.h.b16 %v159
    %v245 = vunpack.c.l.b16 %v160
    %v246 = vunpack.c.h.b16 %v160
    %v247 = vunpack.c.l.b16 %v161
    %v248 = vunpack.c.h.b16 %v161
    %v249 = vunpack.c.l.b16 %v162
    %v250 = vunpack.c.h.b16 %v162
    %v251 = vunpack.c.l.b16 %v163
    %v252 = vunpack.c.h.b16 %v163
    %v253 = vunpack.c.l.b16 %v164
    %v254 = vunpack.c.h.b16 %v164
    %v255 = vunpack.c.l.b16 %v165
    %v256 = vunpack.c.h.b16 %v165
    %v257 = vunpack.c.l.b16 %v166
    %v258 = vunpack.c.h.b16 %v166
    %v259 = vunpack.c.l.b16 %v167
    %v260 = vunpack.c.h.b16 %v167
    %v261 = vunpack.c.l.b16 %v168
    %v262 = vunpack.c.h.b16 %v168
    %v263 = vunpack.c.l.b16 %v169
    %v264 = vunpack.c.h.b16 %v169
    %v265 = vunpack.c.l.b16 %v170
    %v266 = vunpack.c.h.b16 %v170
    %v267 = vunpack.c.l.b16 %v171
    %v268 = vunpack.c.h.b16 %v171
    %v269 = vunpack.c.l.b16 %v172
    %v270 = vunpack.c.h.b16 %v172
    %v271 = vunpack.c.l.b16 %v173
    %v272 = vunpack.c.h.b16 %v173
    %v273 = vunpack.c.l.b16 %v174
    %v274 = vunpack.c.h.b16 %v174
    %v275 = vunpack.c.l.b16 %v175
    %v276 = vunpack.c.h.b16 %v175
    %v277 = vunpack.c.l.b16 %v176
    %v278 = vunpack.c.h.b16 %v176
    %v279 = vpack.c.b16 %v217, %v215
    %v280 = vpack.c.b16 %v218, %v216
    %v281 = vpack.c.b16 %v221, %v219
    %v282 = vpack.c.b16 %v222, %v220
    %v283 = vpack.c.b16 %v225, %v223
    %v284 = vpack.c.b16 %v226, %v224
    %v285 = vpack.c.b16 %v229, %v227
    %v286 = vpack.c.b16 %v230, %v228
    %v287 = vpack.c.b16 %v233, %v231
    %v288 = vpack.c.b16 %v234, %v232
    %v289 = vpack.c.b16 %v237, %v235
    %v290 = vpack.c.b16 %v238, %v236
    %v291 = vpack.c.b16 %v241, %v239
    %v292 = vpack.c.b16 %v242, %v240
    %v293 = vpack.c.b16 %v245, %v243
    %v294 = vpack.c.b16 %v246, %v244
    %v295 = vpack.c.b16 %v249, %v247
    %v296 = vpack.c.b16 %v250, %v248
    %v297 = vpack.c.b16 %v253, %v251
    %v298 = vpack.c.b16 %v254, %v252
    %v299 = vpack.c.b16 %v257, %v255
    %v300 = vpack.c.b16 %v258, %v256
    %v301 = vpack.c.b16 %v261, %v259
    %v302 = vpack.c.b16 %v262, %v260
    %v303 = vpack.c.b16 %v265, %v263
    %v304 = vpack.c.b16 %v266, %v264
    %v305 = vpack.c.b16 %v269, %v267
    %v306 = vpack.c.b16 %v270, %v268
    %v307 = vpack.c.b16 %v273, %v271
    %v308 = vpack.c.b16 %v274, %v272
    %v309 = vpack.c.b16 %v277, %v275
    %v310 = vpack.c.b16 %v278, %v276
    %343 = vmatpush.bf16.msra.mxu0 %v293
    %344 = vmatpush.bf16.msra.mxu0 %v291
    %345 = vmatpush.bf16.msra.mxu0 %v289
    %346 = vmatpush.bf16.msra.mxu0 %v287
    %347 = vmatpush.bf16.msra.mxu0 %v285
    %348 = vmatpush.bf16.msra.mxu0 %v283
    %349 = vmatpush.bf16.msra.mxu0 %v281
    %350 = vmatpush.bf16.msra.mxu0 %v279
    %351 = vmatmul.bf16.gmra.mxu0 %v143
    %v352 = vpop.f32.mrf.mxu0
    %v353 = vadd.f32 %v179, %v352
    %v354 = vpop.f32.mrf.mxu0
    %355 = vdwg.mxu0
    %356 = vmatpush.bf16.msra.mxu0 %v309
    %357 = vmatpush.bf16.msra.mxu0 %v307
    %358 = vmatpush.bf16.msra.mxu0 %v305
    %359 = vmatpush.bf16.msra.mxu0 %v303
    %360 = vmatpush.bf16.msra.mxu0 %v301
    %361 = vmatpush.bf16.msra.mxu0 %v299
    %362 = vmatpush.bf16.msra.mxu0 %v297
    %363 = vmatpush.bf16.msra.mxu0 %v295
    %364 = vmatmul.bf16.gmra.mxu0 %v144
    %v365 = vpop.f32.mrf.mxu0
    %v366 = vadd.f32 %v353, %v365
    %v367 = vpop.f32.mrf.mxu0
    %368 = vdwg.mxu0
    %369 = vmatpush.bf16.msra.mxu0 %v294
    %370 = vmatpush.bf16.msra.mxu0 %v292
    %371 = vmatpush.bf16.msra.mxu0 %v290
    %372 = vmatpush.bf16.msra.mxu0 %v288
    %373 = vmatpush.bf16.msra.mxu0 %v286
    %374 = vmatpush.bf16.msra.mxu0 %v284
    %375 = vmatpush.bf16.msra.mxu0 %v282
    %376 = vmatpush.bf16.msra.mxu0 %v280
    %377 = vmatmul.bf16.gmra.mxu0 %v143
    %v378 = vpop.f32.mrf.mxu0
    %v379 = vadd.f32 %v180, %v378
    %v380 = vpop.f32.mrf.mxu0
    %381 = vdwg.mxu0
    %382 = vmatpush.bf16.msra.mxu0 %v310
    %383 = vmatpush.bf16.msra.mxu0 %v308
    %384 = vmatpush.bf16.msra.mxu0 %v306
    %385 = vmatpush.bf16.msra.mxu0 %v304
    %386 = vmatpush.bf16.msra.mxu0 %v302
    %387 = vmatpush.bf16.msra.mxu0 %v300
    %388 = vmatpush.bf16.msra.mxu0 %v298
    %389 = vmatpush.bf16.msra.mxu0 %v296
    %390 = vmatmul.bf16.gmra.mxu0 %v144
    %v391 = vpop.f32.mrf.mxu0
    %v392 = vadd.f32 %v379, %v391
    %v393 = vpop.f32.mrf.mxu0
    %394 = vdwg.mxu0
    %v395 = vmax.f32 %v366, 0.0
    %v396 = vmax.f32 %v392, 0.0
    %v397 = vpack.c.bf16 %v395, %v395
    %v398 = vpack.c.bf16 %v396, %v396
    %v399 = vld [vmem:[%s5] sm:$0xf]
    %v400 = vld [vmem:[%s5 + $0x4] sm:$0xf]
    %v401 = vld [vmem:[%s5 + $0x8] sm:$0xf]
    %v402 = vld [vmem:[%s5 + $0xc] sm:$0xf]
    %v403 = vld [vmem:[%s5 + $0x10] sm:$0xf]
    %v404 = vld [vmem:[%s5 + $0x14] sm:$0xf]
    %v405 = vld [vmem:[%s5 + $0x18] sm:$0xf]
    %v406 = vld [vmem:[%s5 + $0x1c] sm:$0xf]
    %v407 = vld [vmem:[%s5 + $0x20] sm:$0xf]
    %v408 = vld [vmem:[%s5 + $0x24] sm:$0xf]
    %v409 = vld [vmem:[%s5 + $0x28] sm:$0xf]
    %v410 = vld [vmem:[%s5 + $0x2c] sm:$0xf]
    %v411 = vld [vmem:[%s5 + $0x30] sm:$0xf]
    %v412 = vld [vmem:[%s5 + $0x34] sm:$0xf]
    %v413 = vld [vmem:[%s5 + $0x38] sm:$0xf]
    %v414 = vld [vmem:[%s5 + $0x3c] sm:$0xf]
    %v415 = vld [vmem:[%s5 + $0x40] sm:$0xf]
    %v416 = vld [vmem:[%s5 + $0x44] sm:$0xf]
    %v417 = vld [vmem:[%s5 + $0x48] sm:$0xf]
    %v418 = vld [vmem:[%s5 + $0x4c] sm:$0xf]
    %v419 = vld [vmem:[%s5 + $0x50] sm:$0xf]
    %v420 = vld [vmem:[%s5 + $0x54] sm:$0xf]
    %v421 = vld [vmem:[%s5 + $0x58] sm:$0xf]
    %v422 = vld [vmem:[%s5 + $0x5c] sm:$0xf]
    %v423 = vld [vmem:[%s5 + $0x60] sm:$0xf]
    %v424 = vld [vmem:[%s5 + $0x64] sm:$0xf]
    %v425 = vld [vmem:[%s5 + $0x68] sm:$0xf]
    %v426 = vld [vmem:[%s5 + $0x6c] sm:$0xf]
    %v427 = vld [vmem:[%s5 + $0x70] sm:$0xf]
    %v428 = vld [vmem:[%s5 + $0x74] sm:$0xf]
    %v429 = vld [vmem:[%s5 + $0x78] sm:$0xf]
    %v430 = vld [vmem:[%s5 + $0x7c] sm:$0xf]
    %v431 = vld [vmem:[%s6] sm:$0x1]
    %v433 = vperm.slane %v431, 0
    %v467 = vunpack.c.l.b16 %v399
    %v468 = vunpack.c.l.b16 %v400
    %v469 = vunpack.c.l.b16 %v401
    %v470 = vunpack.c.l.b16 %v402
    %v471 = vunpack.c.l.b16 %v403
    %v472 = vunpack.c.l.b16 %v404
    %v473 = vunpack.c.l.b16 %v405
    %v474 = vunpack.c.l.b16 %v406
    %v475 = vunpack.c.l.b16 %v407
    %v476 = vunpack.c.l.b16 %v408
    %v477 = vunpack.c.l.b16 %v409
    %v478 = vunpack.c.l.b16 %v410
    %v479 = vunpack.c.l.b16 %v411
    %v480 = vunpack.c.l.b16 %v412
    %v481 = vunpack.c.l.b16 %v413
    %v482 = vunpack.c.l.b16 %v414
    %v483 = vunpack.c.l.b16 %v415
    %v484 = vunpack.c.l.b16 %v416
    %v485 = vunpack.c.l.b16 %v417
    %v486 = vunpack.c.l.b16 %v418
    %v487 = vunpack.c.l.b16 %v419
    %v488 = vunpack.c.l.b16 %v420
    %v489 = vunpack.c.l.b16 %v421
    %v490 = vunpack.c.l.b16 %v422
    %v491 = vunpack.c.l.b16 %v423
    %v492 = vunpack.c.l.b16 %v424
    %v493 = vunpack.c.l.b16 %v425
    %v494 = vunpack.c.l.b16 %v426
    %v495 = vunpack.c.l.b16 %v427
    %v496 = vunpack.c.l.b16 %v428
    %v497 = vunpack.c.l.b16 %v429
    %v498 = vunpack.c.l.b16 %v430
    %v499 = vpack.c.b16 %v468, %v467
    %v500 = vpack.c.b16 %v470, %v469
    %v501 = vpack.c.b16 %v472, %v471
    %v502 = vpack.c.b16 %v474, %v473
    %v503 = vpack.c.b16 %v476, %v475
    %v504 = vpack.c.b16 %v478, %v477
    %v505 = vpack.c.b16 %v480, %v479
    %v506 = vpack.c.b16 %v482, %v481
    %v507 = vpack.c.b16 %v484, %v483
    %v508 = vpack.c.b16 %v486, %v485
    %v509 = vpack.c.b16 %v488, %v487
    %v510 = vpack.c.b16 %v490, %v489
    %v511 = vpack.c.b16 %v492, %v491
    %v512 = vpack.c.b16 %v494, %v493
    %v513 = vpack.c.b16 %v496, %v495
    %v514 = vpack.c.b16 %v498, %v497
    %531 = vmatpush.bf16.msra.mxu0 %v506
    %532 = vmatpush.bf16.msra.mxu0 %v505
    %533 = vmatpush.bf16.msra.mxu0 %v504
    %534 = vmatpush.bf16.msra.mxu0 %v503
    %535 = vmatpush.bf16.msra.mxu0 %v502
    %536 = vmatpush.bf16.msra.mxu0 %v501
    %537 = vmatpush.bf16.msra.mxu0 %v500
    %538 = vmatpush.bf16.msra.mxu0 %v499
    %539 = vmatmul.bf16.gmra.mxu0 %v397
    %v540 = vpop.f32.mrf.mxu0
    %v541 = vadd.f32 %v433, %v540
    %v542 = vpop.f32.mrf.mxu0
    %543 = vdwg.mxu0
    %544 = vmatpush.bf16.msra.mxu0 %v514
    %545 = vmatpush.bf16.msra.mxu0 %v513
    %546 = vmatpush.bf16.msra.mxu0 %v512
    %547 = vmatpush.bf16.msra.mxu0 %v511
    %548 = vmatpush.bf16.msra.mxu0 %v510
    %549 = vmatpush.bf16.msra.mxu0 %v509
    %550 = vmatpush.bf16.msra.mxu0 %v508
    %551 = vmatpush.bf16.msra.mxu0 %v507
    %552 = vmatmul.bf16.gmra.mxu0 %v398
    %v553 = vpop.f32.mrf.mxu0
    %v554 = vadd.f32 %v541, %v553
    %v555 = vpop.f32.mrf.mxu0
    %556 = vdwg.mxu0
    %v557 = vmax.f32 %v554, 0.0
    %v558 = vpack.c.bf16 %v557, %v557
    %v559 = vld [vmem:[%s7] sm:$0xf]
    %v560 = vld [vmem:[%s7 + $0x4] sm:$0xf]
    %v561 = vld [vmem:[%s7 + $0x8] sm:$0xf]
    %v562 = vld [vmem:[%s7 + $0xc] sm:$0xf]
    %v563 = vld [vmem:[%s7 + $0x10] sm:$0xf]
    %v564 = vld [vmem:[%s7 + $0x14] sm:$0xf]
    %v565 = vld [vmem:[%s7 + $0x18] sm:$0xf]
    %v566 = vld [vmem:[%s7 + $0x1c] sm:$0xf]
    %v567 = vld [vmem:[%s7 + $0x20] sm:$0xf]
    %v568 = vld [vmem:[%s7 + $0x24] sm:$0xf]
    %v569 = vld [vmem:[%s7 + $0x28] sm:$0xf]
    %v570 = vld [vmem:[%s7 + $0x2c] sm:$0xf]
    %v571 = vld [vmem:[%s7 + $0x30] sm:$0xf]
    %v572 = vld [vmem:[%s7 + $0x34] sm:$0xf]
    %v573 = vld [vmem:[%s7 + $0x38] sm:$0xf]
    %v574 = vld [vmem:[%s7 + $0x3c] sm:$0xf]
    %v575 = vld [vmem:[%s8] sm:$0x1]
    %v577 = vperm.slane %v575, 0
    %v595 = vunpack.c.l.b16 %v559
    %v596 = vunpack.c.l.b16 %v560
    %v597 = vunpack.c.l.b16 %v561
    %v598 = vunpack.c.l.b16 %v562
    %v599 = vunpack.c.l.b16 %v563
    %v600 = vunpack.c.l.b16 %v564
    %v601 = vunpack.c.l.b16 %v565
    %v602 = vunpack.c.l.b16 %v566
    %v603 = vunpack.c.l.b16 %v567
    %v604 = vunpack.c.l.b16 %v568
    %v605 = vunpack.c.l.b16 %v569
    %v606 = vunpack.c.l.b16 %v570
    %v607 = vunpack.c.l.b16 %v571
    %v608 = vunpack.c.l.b16 %v572
    %v609 = vunpack.c.l.b16 %v573
    %v610 = vunpack.c.l.b16 %v574
    %v611 = vpack.c.b16 %v596, %v595
    %v612 = vpack.c.b16 %v598, %v597
    %v613 = vpack.c.b16 %v600, %v599
    %v614 = vpack.c.b16 %v602, %v601
    %v615 = vpack.c.b16 %v604, %v603
    %v616 = vpack.c.b16 %v606, %v605
    %v617 = vpack.c.b16 %v608, %v607
    %v618 = vpack.c.b16 %v610, %v609
    %627 = vmatpush.bf16.msra.mxu0 %v618
    %628 = vmatpush.bf16.msra.mxu0 %v617
    %629 = vmatpush.bf16.msra.mxu0 %v616
    %630 = vmatpush.bf16.msra.mxu0 %v615
    %631 = vmatpush.bf16.msra.mxu0 %v614
    %632 = vmatpush.bf16.msra.mxu0 %v613
    %633 = vmatpush.bf16.msra.mxu0 %v612
    %634 = vmatpush.bf16.msra.mxu0 %v611
    %635 = vmatmul.bf16.gmra.mxu0 %v558
    %v636 = vpop.f32.mrf.mxu0
    %v637 = vadd.f32 %v577, %v636
    %v638 = vpop.f32.mrf.mxu0
    %639 = vdwg.mxu0
    %v640 = vmax.f32 %v637, 0.0
    %v641 = vpack.c.bf16 %v640, %v640
    %v642 = vld [vmem:[%s9] sm:$0xf]
    %v643 = vld [vmem:[%s9 + $0x4] sm:$0xf]
    %v644 = vld [vmem:[%s9 + $0x8] sm:$0xf]
    %v645 = vld [vmem:[%s9 + $0xc] sm:$0xf]
    %v646 = vld [vmem:[%s9 + $0x10] sm:$0xf]
    %v647 = vld [vmem:[%s9 + $0x14] sm:$0xf]
    %v648 = vld [vmem:[%s9 + $0x18] sm:$0xf]
    %v649 = vld [vmem:[%s9 + $0x1c] sm:$0xf]
    %v650 = vld [vmem:[%s10] sm:$0x1]
    %v652 = vperm.slane %v650, 0
    %v662 = vunpack.c.l.b16 %v642
    %v663 = vunpack.c.l.b16 %v643
    %v664 = vunpack.c.l.b16 %v644
    %v665 = vunpack.c.l.b16 %v645
    %v666 = vunpack.c.l.b16 %v646
    %v667 = vunpack.c.l.b16 %v647
    %v668 = vunpack.c.l.b16 %v648
    %v669 = vunpack.c.l.b16 %v649
    %v670 = vpack.c.b16 %v663, %v662
    %v671 = vpack.c.b16 %v665, %v664
    %v672 = vpack.c.b16 %v667, %v666
    %v673 = vpack.c.b16 %v669, %v668
    %vm678 = vcmask 523264
    %v680 = vsel %vm678, %v641, 0
    %682 = vmatpush.bf16.msra.mxu0 0
    %683 = vmatpush.bf16.msra.mxu0 0
    %684 = vmatpush.bf16.msra.mxu0 0
    %685 = vmatpush.bf16.msra.mxu0 0
    %686 = vmatpush.bf16.msra.mxu0 %v673
    %687 = vmatpush.bf16.msra.mxu0 %v672
    %688 = vmatpush.bf16.msra.mxu0 %v671
    %689 = vmatpush.bf16.msra.mxu0 %v670
    %690 = vmatmul.bf16.gmra.mxu0 %v680
    %v691 = vpop.f32.mrf.mxu0
    %v692 = vadd.f32 %v652, %v691
    %v693 = vpop.f32.mrf.mxu0
    %694 = vdwg.mxu0
    %v695 = vmax.f32 %v692, 0.0
    %v696 = vld [vmem:[%s11] sm:$0x1]
    %v698 = vperm.slane %v696, 0
    %v700 = vmul.f32 %v695, %v698
    %v701 = vsel %vm111, %v700, 0.0
    %702 = vadd.xlane.f32.xlu0 %v701
    %v703 = vpop.xlane.xlu0 %702
    %v704 = vld [vmem:[#allocation2] sm:$0x1]
    %v706 = vperm.slane %v704, 0
    %v708 = vadd.f32 %v703, %v706
    %v709 = vxor.u32 %v708, 2147483648
    %v710 = vmul.f32 %v709, 1.442695
    %v711 = vpow.pop %v710
    %v712 = vadd.f32 %v711, 1.0
    %v713 = vrcp.pop %v712
    %v714 = vmul.f32 %v712, %v713
    %v715 = vsub.f32 1.0, %v714
    %v716 = vmul.f32 %v713, %v715
    %v717 = vadd.f32 %v713, %v716
    %vm718 = vweird.f32 %v712
    %vm719 = vweird.f32 %v713
    %vm720 = vmor %vm718, %vm719
    %v721 = vsel %vm720, %v713, %v717
    %v722 = vand.u32 2147483647, %v712
    %vm723 = vcmp.eq.f32.partialorder %v722, 8.507059e+37
    %v724 = vand.u32 %v712, 2147483648
    %v725 = vor.u32 1.1754944e-38, %v724
    %v726 = vsel %vm723, %v725, %v721
    %v727 = vmul.f32 1.0, %v726
    %vm728 = vcmask 7168
    %729 = vst.msk [vmem:[%s13] sm:$0xff] %vm728, %v727
    // Predicated region
    $region62: #{tpu_custom_call.1} parent=1 // pred_check
      _
    $region63: #{tpu_custom_call.1} parent=1 // pred_check_branch
      %731 = sbr.rel (0) target = $region65
    $region64: #{tpu_custom_call.1} parent=1 // pred_region
      _
    $region65: #{tpu_custom_call.1} parent=1 // pred_fallthru
      _
    // Predicated region
    $region66: #{tpu_custom_call.1} parent=1 // pred_check
      _
    $region67: #{tpu_custom_call.1} parent=1 // pred_check_branch
      %733 = sbr.rel (0) target = $region69
    $region68: #{tpu_custom_call.1} parent=1 // pred_region
      _
    $region69: #{tpu_custom_call.1} parent=1 // pred_fallthru
      _
    %734 = vsyncpa [#allocation4], 1
    %735 = vsyncpa [#allocation6], 1

</llo_original>
